<compile_context>
chip_gen: v7x
topology: tpu7x:2x2x1
jax: 0.10.0
libtpu: 0.0.40
codegen_flags: <defaults>
</compile_context>

<pallas_src>
import functools

import jax
import jax.numpy as jnp
from jax.experimental import pallas as pl
from jax.experimental.pallas import tpu as pltpu

LN_EPS = 1e-5          # torch.nn.LayerNorm default eps
SLAB_LANES = 128       # lane-dense output / weight padding width


# ------------------------------- kernel ------------------------------------ #

def _ln_core(x):
    """LayerNorm without affine (gamma/beta are folded into the node weights)."""
    mean = jnp.mean(x, axis=-1, keepdims=True)
    var = jnp.mean(jnp.square(x - mean), axis=-1, keepdims=True)
    return (x - mean) * jax.lax.rsqrt(var + LN_EPS)


def _fused_forward_kernel(dims, ca_ref, cd_ref, cw_ref, cb_ref, w_ref, b_ref,
                          out_ref):
    # Fused torch.cat + permute + Linear(2,1) + permute + squeeze (pure VPU):
    #   new_data[b,d] = w00*cA[b,d] + w01*cD[b,d] + bias
    w00 = cw_ref[0, 0]
    w01 = cw_ref[0, 1]
    b0 = cb_ref[0]
    ca = ca_ref[...].astype(jnp.float32)
    cd = cd_ref[...].astype(jnp.float32)
    nd = ca * w00 + cd * w01 + b0                       # (B, D), computed once

    B = nd.shape[0]
    D = nd.shape[-1]

    # Both chains lane-concatenated: lanes [0:Din) = cA chain, [Din:2Din) = cD.
    x = jnp.concatenate([nd, nd], axis=-1)              # (B, 2*D0)

    row = 0
    for i, (din, dout) in enumerate(dims):
        # Per-chain LayerNorm core (segmented over the two lane halves).
        za = _ln_core(x[:, :din])
        zd = _ln_core(x[:, din:2 * din])
        z = jnp.concatenate([za, zd], axis=-1)           # (B, 2*din)
        # One block-diagonal, lane-padded matmul for both chains at this level.
        w_blk = w_ref[row:row + 2 * din, :]              # (2*din, 128), static slice
        y = jnp.dot(z, w_blk, preferred_element_type=jnp.float32)
        y = y + b_ref[i:i + 1, :]                        # (B, 128); lanes >=2*dout are 0
        x = y[:, :2 * dout]                              # real part for the next level
        row += 2 * din

    # Lane-dense epilogue: [cA_out | cD_out | new_data | 0-pad] -> one store.
    dout_last = dims[-1][1]
    pieces = [x, nd]
    pad_w = SLAB_LANES - 2 * dout_last - D
    if pad_w > 0:
        pieces.append(jnp.zeros((B, pad_w), jnp.float32))
    out_ref[...] = jnp.concatenate(pieces, axis=-1).astype(out_ref.dtype)


# ------------------------------- wrapper ------------------------------------ #

@functools.partial(jax.jit, static_argnames=("dims",))
def classification_net_forward(cA_data, cD_data, concat_w, concat_b,
                               w_all, b_all, *, dims):
    B = cA_data.shape[0]
    D = cA_data.shape[-1]
    dout_last = dims[-1][1]
    assert 2 * dout_last + D <= SLAB_LANES, "outputs do not fit one 128-lane slab"

    # (B,1,1,D) is memory-identical to (B,D): free reshape, no data movement.
    ca = cA_data.reshape(B, D)
    cd = cD_data.reshape(B, D)

    vmem = pl.BlockSpec(memory_space=pltpu.MemorySpace.VMEM)
    smem = pl.BlockSpec(memory_space=pltpu.MemorySpace.SMEM)

    slab = pl.pallas_call(
        functools.partial(_fused_forward_kernel, dims),
        out_shape=jax.ShapeDtypeStruct((B, SLAB_LANES), jnp.float32),
        in_specs=[vmem, vmem, smem, smem, vmem, vmem],
        out_specs=vmem,
    )(ca, cd, concat_w, concat_b, w_all, b_all)

    out_a = slab[:, :dout_last].astype(cA_data.dtype)
    out_d = slab[:, dout_last:2 * dout_last].astype(cA_data.dtype)
    new_data = slab[:, 2 * dout_last:2 * dout_last + D].astype(cA_data.dtype)
    return out_a, out_d, new_data


# ------------------------- parameter construction --------------------------- #

def init_linear(key, out_dim, in_dim):
    kw, kb = jax.random.split(key)
    bound = 1.0 / jnp.sqrt(in_dim)
    w = jax.random.uniform(kw, (out_dim, in_dim), jnp.float32, -bound, bound)
    b = jax.random.uniform(kb, (out_dim,), jnp.float32, -bound, bound)
    return w, b


def init_node(key, input_dim, hidden_dim):
    k1, k2 = jax.random.split(key)
    gamma = jnp.ones((input_dim,), jnp.float32)      # LayerNorm weight
    beta = jnp.zeros((input_dim,), jnp.float32)      # LayerNorm bias
    w2, b2 = init_linear(k1, input_dim, input_dim)   # linear2: (Din, Din)
    w, b = init_linear(k2, hidden_dim, input_dim)    # linear : (Dout, Din)
    return (gamma, beta, w2, b2, w, b)


def init_params(key, input_dims, hidden_dims):
    n = len(input_dims)
    keys = jax.random.split(key, 2 * n + 1)
    concat_w, concat_b = init_linear(keys[0], 1, 2)  # Linear(2, 1)
    cA_net = [init_node(keys[1 + i], input_dims[i], hidden_dims[i])
              for i in range(n)]
    cD_net = [init_node(keys[1 + n + i], input_dims[i], hidden_dims[i])
              for i in range(n)]
    return {"concat_w": concat_w, "concat_b": concat_b,
            "cA_net": cA_net, "cD_net": cD_net}


def _fold_node(node_params):
    """Fold LayerNorm-affine + (linear2 + residual) + linear into one matmul
    on the normalized-unaffined input z:
        out = z @ Wf + bf,
        Wf = diag(gamma)·(W2ᵀ+I)·Wᵀ,  bf = (beta·(W2ᵀ+I)+b2)·Wᵀ + b.
    """
    gamma, beta, w2, b2, w, b = node_params
    din = gamma.shape[0]
    a = w2.T + jnp.eye(din, dtype=jnp.float32)       # xn @ a == xn@W2ᵀ + xn
    wf = (gamma[:, None] * a) @ w.T                  # (Din, Dout)
    bf = (beta @ a + b2) @ w.T + b                   # (Dout,)
    return wf, bf


def pack_params(params):
    """One-time repack:
      * fold each node to a single matmul (weights above),
      * block-diagonalize the cA/cD pair per level into one (2*Din, 128) slab,
      * stack all levels' weights into ONE VMEM blob + ONE bias blob.
    """
    dims = []
    w_rows = []
    b_rows = []
    for pa, pd in zip(params["cA_net"], params["cD_net"]):
        wa, ba = _fold_node(pa)
        wd, bd = _fold_node(pd)
        din, dout = wa.shape
        assert 2 * dout <= SLAB_LANES
        wblk = jnp.zeros((2 * din, SLAB_LANES), jnp.float32)
        wblk = wblk.at[:din, :dout].set(wa)                  # cA block (top-left)
        wblk = wblk.at[din:, dout:2 * dout].set(wd)          # cD block (bottom-right)
        w_rows.append(wblk)
        brow = jnp.zeros((SLAB_LANES,), jnp.float32)
        brow = brow.at[:dout].set(ba).at[dout:2 * dout].set(bd)
        b_rows.append(brow)
        dims.append((int(din), int(dout)))
    return {"concat_w": params["concat_w"],                  # (1, 2) -> SMEM
            "concat_b": params["concat_b"],                  # (1,)   -> SMEM
            "w_all": jnp.concatenate(w_rows, axis=0),        # (sum 2*Din, 128)
            "b_all": jnp.stack(b_rows, axis=0),              # (n_nodes, 128)
            "dims": tuple(dims)}                             # static metadata


# ------------------------------- reference ----------------------------------- #

def node_ref(x, node_params):
    gamma, beta, w2, b2, w, b = node_params
    mean = jnp.mean(x, axis=-1, keepdims=True)
    var = jnp.mean(jnp.square(x - mean), axis=-1, keepdims=True)
    xn = (x - mean) / jnp.sqrt(var + LN_EPS) * gamma + beta
    y = xn @ w2.T + b2 + xn
    return y @ w.T + b


def net_ref(cA_data, cD_data, params):
    ca = cA_data[:, 0, 0, :]
    cd = cD_data[:, 0, 0, :]
    stacked = jnp.stack([ca, cd], axis=-1)                       # (B, D, 2)
    new_data = (stacked @ params["concat_w"].T + params["concat_b"])[..., 0]
    xa = new_data
    for p in params["cA_net"]:
        xa = node_ref(xa, p)
    xd = new_data
    for p in params["cD_net"]:
        xd = node_ref(xd, p)
    return xa, xd, new_data


# --------------------------------- main --------------------------------------- #

if __name__ == "__main__":
    # config: two ClassificationNodes chained in each Sequential.
    input_linear_dim = [32, 16]
    hidden_linear_dim = [16, 8]
    B, D = 2, input_linear_dim[0]

    key = jax.random.PRNGKey(0)
    k_ca, k_cd, k_par = jax.random.split(key, 3)

    cA_data = jax.random.normal(k_ca, (B, 1, 1, D), jnp.float32)
    cD_data = jax.random.normal(k_cd, (B, 1, 1, D), jnp.float32)
    params = init_params(k_par, input_linear_dim, hidden_linear_dim)
    packed = pack_params(params)   # one-time: folded, block-diag, blob-packed

    out_a, out_d, new_data = classification_net_forward(
        cA_data, cD_data, packed["concat_w"], packed["concat_b"],
        packed["w_all"], packed["b_all"], dims=packed["dims"])
    jax.block_until_ready((out_a, out_d, new_data))

    ref_a, ref_d, ref_new = net_ref(cA_data, cD_data, params)
    assert out_a.shape == (B, hidden_linear_dim[-1])
    assert out_d.shape == (B, hidden_linear_dim[-1])
    assert new_data.shape == (B, D)
    # Folded weights change float summation order slightly -> 1e-4 tolerance.
    assert jnp.allclose(out_a, ref_a, atol=1e-4, rtol=1e-4)
    assert jnp.allclose(out_d, ref_d, atol=1e-4, rtol=1e-4)
    assert jnp.allclose(new_data, ref_new, atol=1e-5, rtol=1e-5)

    print("KERNEL_OK")
</pallas_src>

<mosaic_0001>
module attributes {stable_mosaic.version = 11 : i64} {
  func.func @_fused_forward_kernel(%arg0: memref<2x32xf32, #tpu.memory_space<vmem>>, %arg1: memref<2x32xf32, #tpu.memory_space<vmem>>, %arg2: memref<1x2xf32, #tpu.memory_space<smem>>, %arg3: memref<1xf32, #tpu.memory_space<smem>>, %arg4: memref<96x128xf32, #tpu.memory_space<vmem>>, %arg5: memref<2x128xf32, #tpu.memory_space<vmem>>, %arg6: memref<2x128xf32, #tpu.memory_space<vmem>>) attributes {dimension_semantics = [], scalar_prefetch = 0 : i64, scratch_operands = 0 : i64, tpu.core_type = #tpu.core_type<tc>} {
    %c0 = arith.constant 0 : index
    %c0_0 = arith.constant 0 : index
    %0 = memref.load %arg2[%c0, %c0_0] : memref<1x2xf32, #tpu.memory_space<smem>>
    %c0_1 = arith.constant 0 : index
    %c1 = arith.constant 1 : index
    %1 = memref.load %arg2[%c0_1, %c1] : memref<1x2xf32, #tpu.memory_space<smem>>
    %c0_2 = arith.constant 0 : index
    %2 = memref.load %arg3[%c0_2] : memref<1xf32, #tpu.memory_space<smem>>
    %c0_3 = arith.constant 0 : index
    %c0_4 = arith.constant 0 : index
    %3 = vector.load %arg0[%c0_3, %c0_4] : memref<2x32xf32, #tpu.memory_space<vmem>>, vector<2x32xf32>
    %c0_5 = arith.constant 0 : index
    %c0_6 = arith.constant 0 : index
    %4 = vector.load %arg1[%c0_5, %c0_6] : memref<2x32xf32, #tpu.memory_space<vmem>>, vector<2x32xf32>
    %5 = vector.broadcast %0 : f32 to vector<2x32xf32>
    %6 = arith.mulf %3, %5 : vector<2x32xf32>
    %7 = vector.broadcast %1 : f32 to vector<2x32xf32>
    %8 = arith.mulf %4, %7 : vector<2x32xf32>
    %9 = arith.addf %6, %8 : vector<2x32xf32>
    %10 = vector.broadcast %2 : f32 to vector<2x32xf32>
    %11 = arith.addf %9, %10 : vector<2x32xf32>
    %12 = tpu.concatenate %11, %11 in 1 : vector<2x32xf32>, vector<2x32xf32> -> vector<2x64xf32>
    %13 = vector.extract_strided_slice %12 {offsets = [0, 0], sizes = [2, 32], strides = [1, 1]} : vector<2x64xf32> to vector<2x32xf32>
    %cst = arith.constant dense<0.000000e+00> : vector<2xf32>
    %14 = vector.multi_reduction <add>, %13, %cst [1] : vector<2x32xf32> to vector<2xf32>
    %15 = vector.shape_cast %14 : vector<2xf32> to vector<2x1xf32>
    %cst_7 = arith.constant 3.200000e+01 : f32
    %16 = vector.broadcast %cst_7 : f32 to vector<2x1xf32>
    %17 = arith.divf %15, %16 : vector<2x1xf32>
    %18 = vector.broadcast %17 : vector<2x1xf32> to vector<2x32xf32>
    %19 = arith.subf %13, %18 : vector<2x32xf32>
    %20 = arith.mulf %19, %19 : vector<2x32xf32>
    %cst_8 = arith.constant dense<0.000000e+00> : vector<2xf32>
    %21 = vector.multi_reduction <add>, %20, %cst_8 [1] : vector<2x32xf32> to vector<2xf32>
    %22 = vector.shape_cast %21 : vector<2xf32> to vector<2x1xf32>
    %cst_9 = arith.constant 3.200000e+01 : f32
    %23 = vector.broadcast %cst_9 : f32 to vector<2x1xf32>
    %24 = arith.divf %22, %23 : vector<2x1xf32>
    %25 = vector.broadcast %17 : vector<2x1xf32> to vector<2x32xf32>
    %26 = arith.subf %13, %25 : vector<2x32xf32>
    %cst_10 = arith.constant 9.99999974E-6 : f32
    %27 = vector.broadcast %cst_10 : f32 to vector<2x1xf32>
    %28 = arith.addf %24, %27 : vector<2x1xf32>
    %29 = math.rsqrt %28 : vector<2x1xf32>
    %30 = vector.broadcast %29 : vector<2x1xf32> to vector<2x32xf32>
    %31 = arith.mulf %26, %30 : vector<2x32xf32>
    %32 = vector.extract_strided_slice %12 {offsets = [0, 32], sizes = [2, 32], strides = [1, 1]} : vector<2x64xf32> to vector<2x32xf32>
    %cst_11 = arith.constant dense<0.000000e+00> : vector<2xf32>
    %33 = vector.multi_reduction <add>, %32, %cst_11 [1] : vector<2x32xf32> to vector<2xf32>
    %34 = vector.shape_cast %33 : vector<2xf32> to vector<2x1xf32>
    %cst_12 = arith.constant 3.200000e+01 : f32
    %35 = vector.broadcast %cst_12 : f32 to vector<2x1xf32>
    %36 = arith.divf %34, %35 : vector<2x1xf32>
    %37 = vector.broadcast %36 : vector<2x1xf32> to vector<2x32xf32>
    %38 = arith.subf %32, %37 : vector<2x32xf32>
    %39 = arith.mulf %38, %38 : vector<2x32xf32>
    %cst_13 = arith.constant dense<0.000000e+00> : vector<2xf32>
    %40 = vector.multi_reduction <add>, %39, %cst_13 [1] : vector<2x32xf32> to vector<2xf32>
    %41 = vector.shape_cast %40 : vector<2xf32> to vector<2x1xf32>
    %cst_14 = arith.constant 3.200000e+01 : f32
    %42 = vector.broadcast %cst_14 : f32 to vector<2x1xf32>
    %43 = arith.divf %41, %42 : vector<2x1xf32>
    %44 = vector.broadcast %36 : vector<2x1xf32> to vector<2x32xf32>
    %45 = arith.subf %32, %44 : vector<2x32xf32>
    %cst_15 = arith.constant 9.99999974E-6 : f32
    %46 = vector.broadcast %cst_15 : f32 to vector<2x1xf32>
    %47 = arith.addf %43, %46 : vector<2x1xf32>
    %48 = math.rsqrt %47 : vector<2x1xf32>
    %49 = vector.broadcast %48 : vector<2x1xf32> to vector<2x32xf32>
    %50 = arith.mulf %45, %49 : vector<2x32xf32>
    %51 = tpu.concatenate %31, %50 in 1 : vector<2x32xf32>, vector<2x32xf32> -> vector<2x64xf32>
    %c0_16 = arith.constant 0 : index
    %c0_17 = arith.constant 0 : index
    %52 = vector.load %arg4[%c0_16, %c0_17] : memref<96x128xf32, #tpu.memory_space<vmem>>, vector<64x128xf32>
    %cst_18 = arith.constant dense<0.000000e+00> : vector<2x128xf32>
    %53 = tpu.matmul %51, %52, %cst_18 {dimension_numbers = #tpu.dot_dimension_numbers<[1], [0], [0], [1], [0, 0, 1, 1], [], []>} : vector<2x64xf32>, vector<64x128xf32>, vector<2x128xf32> -> vector<2x128xf32>
    %c0_19 = arith.constant 0 : index
    %c0_20 = arith.constant 0 : index
    %54 = vector.load %arg5[%c0_19, %c0_20] : memref<2x128xf32, #tpu.memory_space<vmem>>, vector<1x128xf32>
    %55 = vector.broadcast %54 : vector<1x128xf32> to vector<2x128xf32>
    %56 = arith.addf %53, %55 : vector<2x128xf32>
    %57 = vector.extract_strided_slice %56 {offsets = [0, 0], sizes = [2, 32], strides = [1, 1]} : vector<2x128xf32> to vector<2x32xf32>
    %58 = vector.extract_strided_slice %57 {offsets = [0, 0], sizes = [2, 16], strides = [1, 1]} : vector<2x32xf32> to vector<2x16xf32>
    %cst_21 = arith.constant dense<0.000000e+00> : vector<2xf32>
    %59 = vector.multi_reduction <add>, %58, %cst_21 [1] : vector<2x16xf32> to vector<2xf32>
    %60 = vector.shape_cast %59 : vector<2xf32> to vector<2x1xf32>
    %cst_22 = arith.constant 1.600000e+01 : f32
    %61 = vector.broadcast %cst_22 : f32 to vector<2x1xf32>
    %62 = arith.divf %60, %61 : vector<2x1xf32>
    %63 = vector.broadcast %62 : vector<2x1xf32> to vector<2x16xf32>
    %64 = arith.subf %58, %63 : vector<2x16xf32>
    %65 = arith.mulf %64, %64 : vector<2x16xf32>
    %cst_23 = arith.constant dense<0.000000e+00> : vector<2xf32>
    %66 = vector.multi_reduction <add>, %65, %cst_23 [1] : vector<2x16xf32> to vector<2xf32>
    %67 = vector.shape_cast %66 : vector<2xf32> to vector<2x1xf32>
    %cst_24 = arith.constant 1.600000e+01 : f32
    %68 = vector.broadcast %cst_24 : f32 to vector<2x1xf32>
    %69 = arith.divf %67, %68 : vector<2x1xf32>
    %70 = vector.broadcast %62 : vector<2x1xf32> to vector<2x16xf32>
    %71 = arith.subf %58, %70 : vector<2x16xf32>
    %cst_25 = arith.constant 9.99999974E-6 : f32
    %72 = vector.broadcast %cst_25 : f32 to vector<2x1xf32>
    %73 = arith.addf %69, %72 : vector<2x1xf32>
    %74 = math.rsqrt %73 : vector<2x1xf32>
    %75 = vector.broadcast %74 : vector<2x1xf32> to vector<2x16xf32>
    %76 = arith.mulf %71, %75 : vector<2x16xf32>
    %77 = vector.extract_strided_slice %57 {offsets = [0, 16], sizes = [2, 16], strides = [1, 1]} : vector<2x32xf32> to vector<2x16xf32>
    %cst_26 = arith.constant dense<0.000000e+00> : vector<2xf32>
    %78 = vector.multi_reduction <add>, %77, %cst_26 [1] : vector<2x16xf32> to vector<2xf32>
    %79 = vector.shape_cast %78 : vector<2xf32> to vector<2x1xf32>
    %cst_27 = arith.constant 1.600000e+01 : f32
    %80 = vector.broadcast %cst_27 : f32 to vector<2x1xf32>
    %81 = arith.divf %79, %80 : vector<2x1xf32>
    %82 = vector.broadcast %81 : vector<2x1xf32> to vector<2x16xf32>
    %83 = arith.subf %77, %82 : vector<2x16xf32>
    %84 = arith.mulf %83, %83 : vector<2x16xf32>
    %cst_28 = arith.constant dense<0.000000e+00> : vector<2xf32>
    %85 = vector.multi_reduction <add>, %84, %cst_28 [1] : vector<2x16xf32> to vector<2xf32>
    %86 = vector.shape_cast %85 : vector<2xf32> to vector<2x1xf32>
    %cst_29 = arith.constant 1.600000e+01 : f32
    %87 = vector.broadcast %cst_29 : f32 to vector<2x1xf32>
    %88 = arith.divf %86, %87 : vector<2x1xf32>
    %89 = vector.broadcast %81 : vector<2x1xf32> to vector<2x16xf32>
    %90 = arith.subf %77, %89 : vector<2x16xf32>
    %cst_30 = arith.constant 9.99999974E-6 : f32
    %91 = vector.broadcast %cst_30 : f32 to vector<2x1xf32>
    %92 = arith.addf %88, %91 : vector<2x1xf32>
    %93 = math.rsqrt %92 : vector<2x1xf32>
    %94 = vector.broadcast %93 : vector<2x1xf32> to vector<2x16xf32>
    %95 = arith.mulf %90, %94 : vector<2x16xf32>
    %96 = tpu.concatenate %76, %95 in 1 : vector<2x16xf32>, vector<2x16xf32> -> vector<2x32xf32>
    %c64 = arith.constant 64 : index
    %c0_31 = arith.constant 0 : index
    %97 = vector.load %arg4[%c64, %c0_31] : memref<96x128xf32, #tpu.memory_space<vmem>>, vector<32x128xf32>
    %cst_32 = arith.constant dense<0.000000e+00> : vector<2x128xf32>
    %98 = tpu.matmul %96, %97, %cst_32 {dimension_numbers = #tpu.dot_dimension_numbers<[1], [0], [0], [1], [0, 0, 1, 1], [], []>} : vector<2x32xf32>, vector<32x128xf32>, vector<2x128xf32> -> vector<2x128xf32>
    %c1_33 = arith.constant 1 : index
    %c0_34 = arith.constant 0 : index
    %99 = vector.load %arg5[%c1_33, %c0_34] : memref<2x128xf32, #tpu.memory_space<vmem>>, vector<1x128xf32>
    %100 = vector.broadcast %99 : vector<1x128xf32> to vector<2x128xf32>
    %101 = arith.addf %98, %100 : vector<2x128xf32>
    %102 = vector.extract_strided_slice %101 {offsets = [0, 0], sizes = [2, 16], strides = [1, 1]} : vector<2x128xf32> to vector<2x16xf32>
    %cst_35 = arith.constant 0.000000e+00 : f32
    %103 = vector.broadcast %cst_35 : f32 to vector<2x80xf32>
    %104 = tpu.concatenate %102, %11, %103 in 1 : vector<2x16xf32>, vector<2x32xf32>, vector<2x80xf32> -> vector<2x128xf32>
    %c0_36 = arith.constant 0 : index
    %c0_37 = arith.constant 0 : index
    %105 = vector.load %arg6[%c0_36, %c0_37] : memref<2x128xf32, #tpu.memory_space<vmem>>, vector<2x128xf32>
    tpu.vector_store %arg6[%c0_36, %c0_37], %104 {strides = array<i32>} : memref<2x128xf32, #tpu.memory_space<vmem>>, vector<2x128xf32>,
    return
  }
}

</mosaic_0001>

<llo_original>
// kernel: classification_net_forward.1
$region0: #{classification_net_forward.1}
  #allocation0 [shape = 'u32[]', space=smem, size = 0x4, offset = 0x4, fixed_abs, tag = 'smem constant byte address 0x4 - core index']
  #allocation1 [shape = 'u32[144,128]{1,0:T(1,128)}', space=vmem, size = 0x12000, scoped, tag = 'internal scratch']
  #allocation2 [shape = 'f32[1]{0:T(128)S(6)}', space=smem, size = 0x200, scoped, tag = 'scoped memory for classification_net_forward.1']
  %s0 = inlined_call_operand.vmem [shape: f32[2,32], index: 0, kind: input, shape index: {}]
  %s1 = inlined_call_operand.vmem [shape: f32[2,32], index: 1, kind: input, shape index: {}]
  %s2 = inlined_call_operand.vmem [shape: f32[1,2], index: 2, kind: input, shape index: {}]
  %s3 = inlined_call_operand.<no memory space> [shape: f32[1], index: 3, kind: input, shape index: {}]
  %s4 = inlined_call_operand.hbm [shape: f32[96,128], index: 4, kind: input, shape index: {}]
  %s5 = inlined_call_operand.vmem [shape: f32[2,128], index: 5, kind: input, shape index: {}]
  %s6 = inlined_call_operand.vmem [shape: f32[2,128], index: 6, kind: output, shape index: {}]
  %s7 = sld [smem:[#allocation0]]
  $region42: #{classification_net_forward.1} parent=0
    _
  %s9 = ssub.s32 1, %s7
  %s10 = scalar_select 0, %s9, %s7
  %11 = sst [smem:[#allocation2]] %s3
  $region1: #{classification_net_forward.1} parent=0
    #allocation3 [shape = 'u8[512]{0}', space=smem, size = 0x200, scoped, tag = 'input window, operand 2, single buffered']
    #allocation4 [shape = 's32[1]{0}', space=sflag, size = 0x4, scoped, tag = 'scoped memory for classification_net_forward.1']
    #allocation5 [shape = 's32[1]{0}', space=sflag, size = 0x4, scoped, tag = 'scoped memory for classification_net_forward.1']
    #allocation6 [shape = 'u8[49152]{0}', space=vmem, size = 0xc000, scoped, tag = 'input window, operand 4, single buffered']
    %12 = vsyncpa [#allocation5], 0
    %13 = vsyncpa [#allocation4], 0
    // Predicated region
    $region2: #{classification_net_forward.1} parent=1 // pred_check
      _
    $region3: #{classification_net_forward.1} parent=1 // pred_check_branch
      %15 = sbr.rel (0) target = $region5
    $region4: #{classification_net_forward.1} parent=1 // pred_region
      _
    $region5: #{classification_net_forward.1} parent=1 // pred_fallthru
      _
    // Predicated region
    $region6: #{classification_net_forward.1} parent=1 // pred_check
      _
    $region7: #{classification_net_forward.1} parent=1 // pred_check_branch
      %17 = sbr.rel (0) target = $region9
    $region8: #{classification_net_forward.1} parent=1 // pred_region
      _
    $region9: #{classification_net_forward.1} parent=1 // pred_fallthru
      _
    // Predicated region
    $region10: #{classification_net_forward.1} parent=1 // pred_check
      _
    $region11: #{classification_net_forward.1} parent=1 // pred_check_branch
      %19 = sbr.rel (0) target = $region13
    $region12: #{classification_net_forward.1} parent=1 // pred_region
      %s21 = ssub.s32 16, 16
      %22 = vsyncadd [#allocation5], %s21
      %s24 = sshll.u32 %s2, 4
      %s25 = int_to_ptr.vmem [resolvable:$true] %s24
      %27 = dma.vmem_to_smem %s25, 16, [#allocation3], [#allocation5]
    $region13: #{classification_net_forward.1} parent=1 // pred_fallthru
      _
    // Predicated region
    $region14: #{classification_net_forward.1} parent=1 // pred_check
      _
    $region15: #{classification_net_forward.1} parent=1 // pred_check_branch
      %29 = sbr.rel (0) target = $region17
    $region16: #{classification_net_forward.1} parent=1 // pred_region
      _
    $region17: #{classification_net_forward.1} parent=1 // pred_fallthru
      _
    // Predicated region
    $region18: #{classification_net_forward.1} parent=1 // pred_check
      _
    $region19: #{classification_net_forward.1} parent=1 // pred_check_branch
      %31 = sbr.rel (0) target = $region21
    $region20: #{classification_net_forward.1} parent=1 // pred_region
      %s33 = ssub.s32 1536, 1536
      %34 = vsyncadd [#allocation4], %s33
      %s35 = sshll.u32 [#allocation6], 4
      %s36 = int_to_ptr.vmem [resolvable:$true] %s35
      %41 = dma.hbm_to_vmem [thread:$0]  %s4, 1536, %s36, [#allocation4], 128, 128, 8
    $region21: #{classification_net_forward.1} parent=1 // pred_fallthru
      _
    // Predicated region
    $region22: #{classification_net_forward.1} parent=1 // pred_check
      _
    $region23: #{classification_net_forward.1} parent=1 // pred_check_branch
      %43 = sbr.rel (0) target = $region25
    $region24: #{classification_net_forward.1} parent=1 // pred_region
      _
    $region25: #{classification_net_forward.1} parent=1 // pred_fallthru
      _
    // Predicated region
    $region26: #{classification_net_forward.1} parent=1 // pred_check
      _
    $region27: #{classification_net_forward.1} parent=1 // pred_check_branch
      %45 = sbr.rel (0) target = $region29
    $region28: #{classification_net_forward.1} parent=1 // pred_region
      %46 = dma.done [#allocation5], 16
    $region29: #{classification_net_forward.1} parent=1 // pred_fallthru
      _
    // Predicated region
    $region30: #{classification_net_forward.1} parent=1 // pred_check
      _
    $region31: #{classification_net_forward.1} parent=1 // pred_check_branch
      %48 = sbr.rel (0) target = $region33
    $region32: #{classification_net_forward.1} parent=1 // pred_region
      %49 = dma.done [#allocation4], 1536
    $region33: #{classification_net_forward.1} parent=1 // pred_fallthru
      _
    %50 = sfence
    %s51 = sld [smem:[#allocation3]]
    %s52 = sld [smem:[#allocation3 + $0x1]]
    %s53 = sld [smem:[#allocation2]]
    %v54 = vld [vmem:[%s0] sm:$0x3]
    %v55 = vld [vmem:[%s1] sm:$0x3]
    %v56 = vstv %s51
    %v57 = vmul.f32 %v54, %v56
    %v58 = vstv %s52
    %v59 = vmul.f32 %v55, %v58
    %v60 = vadd.f32 %v57, %v59
    %v61 = vstv %s53
    %v62 = vadd.f32 %v60, %v61
    %64 = vrot.lane.b32.xlu0 %v62, 32
    %v65 = vpop.permute.xlu0 %64
    %vm67 = vcmask 261120
    %v68 = vsel %vm67, %v62, %v65
    %vm69 = vcmask 254976
    %v70 = vsel %vm69, %v68, 0.0
    %71 = vadd.xlane.f32.xlu0 %v70
    %v72 = vpop.xlane.xlu0 %71
    %v73 = vrcp.pop 32.0
    %v74 = vmul.f32 %v72, %v73
    %v75 = vsub.f32 %v68, %v74
    %v76 = vmul.f32 %v75, %v75
    %v77 = vsel %vm69, %v76, 0.0
    %78 = vadd.xlane.f32.xlu0 %v77
    %v79 = vpop.xlane.xlu0 %78
    %v80 = vmul.f32 %v79, %v73
    %v81 = vadd.f32 %v80, 1e-05
    %v82 = vrsqrt.pop %v81
    %v83 = vmul.f32 %v75, %v82
    %85 = vrot.lane.b32.xlu0 %v68, 96
    %v86 = vpop.permute.xlu0 %85
    %v88 = vsel %vm69, %v86, 0.0
    %89 = vadd.xlane.f32.xlu0 %v88
    %v90 = vpop.xlane.xlu0 %89
    %v91 = vmul.f32 %v90, %v73
    %v92 = vsub.f32 %v68, %v91
    %v93 = vmul.f32 %v92, %v92
    %95 = vrot.lane.b32.xlu0 %v93, 96
    %v96 = vpop.permute.xlu0 %95
    %v98 = vsel %vm69, %v96, 0.0
    %99 = vadd.xlane.f32.xlu0 %v98
    %v100 = vpop.xlane.xlu0 %99
    %v101 = vmul.f32 %v100, %v73
    %v102 = vadd.f32 %v101, 1e-05
    %v103 = vrsqrt.pop %v102
    %v104 = vmul.f32 %v92, %v103
    %v105 = vsel %vm67, %v83, %v104
    %v106 = vld [vmem:[#allocation6] sm:$0xff]
    %v107 = vld [vmem:[#allocation6 + $0x8] sm:$0xff]
    %v108 = vld [vmem:[#allocation6 + $0x10] sm:$0xff]
    %v109 = vld [vmem:[#allocation6 + $0x18] sm:$0xff]
    %v110 = vld [vmem:[#allocation6 + $0x20] sm:$0xff]
    %v111 = vld [vmem:[#allocation6 + $0x28] sm:$0xff]
    %v112 = vld [vmem:[#allocation6 + $0x30] sm:$0xff]
    %v113 = vld [vmem:[#allocation6 + $0x38] sm:$0xff]
    %v114 = vld [vmem:[%s5] sm:$0x1]
    %v115 = vlaneseq
    %v116 = vshrl.u32 %v115, 7
    %v117 = vsub.s32 0, %v116
    %v118 = vrot.slane %v114, %v117
    %vm119 = vcmask 523264
    %v121 = vsel %vm119, %v105, 0
    %123 = vmatprep.subr.mxu0 0.0
    %124 = vmatpush1.msra.mxu0 %v106
    %125 = vmatprep.subr.mxu0 0.0
    %126 = vmatpush1.msra.mxu0 %v107
    %127 = vmatprep.subr.mxu0 0.0
    %128 = vmatpush1.msra.mxu0 %v108
    %129 = vmatprep.subr.mxu0 0.0
    %130 = vmatpush1.msra.mxu0 %v109
    %131 = vmatprep.subr.mxu0 0.0
    %132 = vmatpush1.msra.mxu0 %v110
    %133 = vmatprep.subr.mxu0 0.0
    %134 = vmatpush1.msra.mxu0 %v111
    %135 = vmatprep.subr.mxu0 0.0
    %136 = vmatpush1.msra.mxu0 %v112
    %137 = vmatprep.subr.mxu0 0.0
    %138 = vmatpush1.msra.mxu0 %v113
    %139 = vmatprep.subr.mxu0 0.0
    %140 = vmatpush1.msra.mxu0 0.0
    %141 = vmatprep.subr.mxu0 0.0
    %142 = vmatpush1.msra.mxu0 0.0
    %143 = vmatprep.subr.mxu0 0.0
    %144 = vmatpush1.msra.mxu0 0.0
    %145 = vmatprep.subr.mxu0 0.0
    %146 = vmatpush1.msra.mxu0 0.0
    %147 = vmatprep.subr.mxu0 0.0
    %148 = vmatpush1.msra.mxu0 0.0
    %149 = vmatprep.subr.mxu0 0.0
    %150 = vmatpush1.msra.mxu0 0.0
    %151 = vmatprep.subr.mxu0 0.0
    %152 = vmatpush1.msra.mxu0 0.0
    %153 = vmatprep.subr.mxu0 0.0
    %154 = vmatpush1.msra.mxu0 0.0
    %155 = vmatprep.subr.mxu0 0.0
    %156 = vmatpush1.msra.mxu0 0.0
    %157 = vmatprep.subr.mxu0 0.0
    %158 = vmatpush1.msra.mxu0 0.0
    %159 = vmatprep.subr.mxu0 0.0
    %160 = vmatpush1.msra.mxu0 0.0
    %161 = vmatprep.subr.mxu0 0.0
    %162 = vmatpush1.msra.mxu0 0.0
    %163 = vmatprep.subr.mxu0 0.0
    %164 = vmatpush1.msra.mxu0 0.0
    %165 = vmatprep.subr.mxu0 0.0
    %166 = vmatpush1.msra.mxu0 0.0
    %167 = vmatprep.subr.mxu0 0.0
    %168 = vmatpush1.msra.mxu0 0.0
    %169 = vmatprep.subr.mxu0 0.0
    %170 = vmatpush1.msra.mxu0 0.0
    %171 = vmatprep.subr.mxu0 0.0
    %172 = vmatpush1.msra.mxu0 0.0
    %173 = vmatprep.subr.mxu0 0.0
    %174 = vmatpush1.msra.mxu0 0.0
    %175 = vmatprep.subr.mxu0 0.0
    %176 = vmatpush1.msra.mxu0 0.0
    %177 = vmatprep.subr.mxu0 0.0
    %178 = vmatpush1.msra.mxu0 0.0
    %179 = vmatprep.subr.mxu0 0.0
    %180 = vmatpush1.msra.mxu0 0.0
    %181 = vmatprep.subr.mxu0 0.0
    %182 = vmatpush1.msra.mxu0 0.0
    %183 = vmatprep.subr.mxu0 0.0
    %184 = vmatpush1.msra.mxu0 0.0
    %185 = vmatprep.subr.mxu0 0.0
    %186 = vmatpush1.msra.mxu0 0.0
    %187 = vmatprep.mubr.f32.mxu0 0.0
    %188 = vmatmul.mubr.f32.gmra.mrb[0].mxu0 %v121
    %v189 = vpop.f32.mrb[0].mxu0
    %v190 = vadd.f32 %v118, %v189
    %v191 = vpop.f32.mrb[0].mxu0
    %192 = vdwg.mxu0
    %vm193 = vcmask 123904
    %v194 = vsel %vm193, %v190, 0.0
    %195 = vadd.xlane.f32.xlu0 %v194
    %v196 = vpop.xlane.xlu0 %195
    %v197 = vrcp.pop 16.0
    %v198 = vmul.f32 %v196, %v197
    %v199 = vsub.f32 %v190, %v198
    %v200 = vmul.f32 %v199, %v199
    %v201 = vsel %vm193, %v200, 0.0
    %202 = vadd.xlane.f32.xlu0 %v201
    %v203 = vpop.xlane.xlu0 %202
    %v204 = vmul.f32 %v203, %v197
    %v205 = vadd.f32 %v204, 1e-05
    %v206 = vrsqrt.pop %v205
    %v207 = vmul.f32 %v199, %v206
    %209 = vrot.lane.b32.xlu0 %v190, 112
    %v210 = vpop.permute.xlu0 %209
    %v212 = vsel %vm193, %v210, 0.0
    %213 = vadd.xlane.f32.xlu0 %v212
    %v214 = vpop.xlane.xlu0 %213
    %v215 = vmul.f32 %v214, %v197
    %v216 = vsub.f32 %v190, %v215
    %v217 = vmul.f32 %v216, %v216
    %219 = vrot.lane.b32.xlu0 %v217, 112
    %v220 = vpop.permute.xlu0 %219
    %v222 = vsel %vm193, %v220, 0.0
    %223 = vadd.xlane.f32.xlu0 %v222
    %v224 = vpop.xlane.xlu0 %223
    %v225 = vmul.f32 %v224, %v197
    %v226 = vadd.f32 %v225, 1e-05
    %v227 = vrsqrt.pop %v226
    %v228 = vmul.f32 %v216, %v227
    %vm229 = vcmask 130048
    %v230 = vsel %vm229, %v207, %v228
    %v231 = vld [vmem:[#allocation6 + $0x40] sm:$0xff]
    %v232 = vld [vmem:[#allocation6 + $0x48] sm:$0xff]
    %v233 = vld [vmem:[#allocation6 + $0x50] sm:$0xff]
    %v234 = vld [vmem:[#allocation6 + $0x58] sm:$0xff]
    %v235 = vld [vmem:[%s5 + $0x1] sm:$0x1]
    %v236 = vlaneseq
    %v237 = vshrl.u32 %v236, 7
    %v238 = vsub.s32 0, %v237
    %v239 = vrot.slane %v235, %v238
    %v241 = vsel %vm67, %v230, 0
    %243 = vmatprep.subr.mxu0 0.0
    %244 = vmatpush1.msra.mxu0 %v231
    %245 = vmatprep.subr.mxu0 0.0
    %246 = vmatpush1.msra.mxu0 %v232
    %247 = vmatprep.subr.mxu0 0.0
    %248 = vmatpush1.msra.mxu0 %v233
    %249 = vmatprep.subr.mxu0 0.0
    %250 = vmatpush1.msra.mxu0 %v234
    %251 = vmatprep.subr.mxu0 0.0
    %252 = vmatpush1.msra.mxu0 0.0
    %253 = vmatprep.subr.mxu0 0.0
    %254 = vmatpush1.msra.mxu0 0.0
    %255 = vmatprep.subr.mxu0 0.0
    %256 = vmatpush1.msra.mxu0 0.0
    %257 = vmatprep.subr.mxu0 0.0
    %258 = vmatpush1.msra.mxu0 0.0
    %259 = vmatprep.subr.mxu0 0.0
    %260 = vmatpush1.msra.mxu0 0.0
    %261 = vmatprep.subr.mxu0 0.0
    %262 = vmatpush1.msra.mxu0 0.0
    %263 = vmatprep.subr.mxu0 0.0
    %264 = vmatpush1.msra.mxu0 0.0
    %265 = vmatprep.subr.mxu0 0.0
    %266 = vmatpush1.msra.mxu0 0.0
    %267 = vmatprep.subr.mxu0 0.0
    %268 = vmatpush1.msra.mxu0 0.0
    %269 = vmatprep.subr.mxu0 0.0
    %270 = vmatpush1.msra.mxu0 0.0
    %271 = vmatprep.subr.mxu0 0.0
    %272 = vmatpush1.msra.mxu0 0.0
    %273 = vmatprep.subr.mxu0 0.0
    %274 = vmatpush1.msra.mxu0 0.0
    %275 = vmatprep.subr.mxu0 0.0
    %276 = vmatpush1.msra.mxu0 0.0
    %277 = vmatprep.subr.mxu0 0.0
    %278 = vmatpush1.msra.mxu0 0.0
    %279 = vmatprep.subr.mxu0 0.0
    %280 = vmatpush1.msra.mxu0 0.0
    %281 = vmatprep.subr.mxu0 0.0
    %282 = vmatpush1.msra.mxu0 0.0
    %283 = vmatprep.subr.mxu0 0.0
    %284 = vmatpush1.msra.mxu0 0.0
    %285 = vmatprep.subr.mxu0 0.0
    %286 = vmatpush1.msra.mxu0 0.0
    %287 = vmatprep.subr.mxu0 0.0
    %288 = vmatpush1.msra.mxu0 0.0
    %289 = vmatprep.subr.mxu0 0.0
    %290 = vmatpush1.msra.mxu0 0.0
    %291 = vmatprep.subr.mxu0 0.0
    %292 = vmatpush1.msra.mxu0 0.0
    %293 = vmatprep.subr.mxu0 0.0
    %294 = vmatpush1.msra.mxu0 0.0
    %295 = vmatprep.subr.mxu0 0.0
    %296 = vmatpush1.msra.mxu0 0.0
    %297 = vmatprep.subr.mxu0 0.0
    %298 = vmatpush1.msra.mxu0 0.0
    %299 = vmatprep.subr.mxu0 0.0
    %300 = vmatpush1.msra.mxu0 0.0
    %301 = vmatprep.subr.mxu0 0.0
    %302 = vmatpush1.msra.mxu0 0.0
    %303 = vmatprep.subr.mxu0 0.0
    %304 = vmatpush1.msra.mxu0 0.0
    %305 = vmatprep.subr.mxu0 0.0
    %306 = vmatpush1.msra.mxu0 0.0
    %307 = vmatprep.mubr.f32.mxu0 0.0
    %308 = vmatmul.mubr.f32.gmra.mrb[0].mxu0 %v241
    %v309 = vpop.f32.mrb[0].mxu0
    %v310 = vadd.f32 %v239, %v309
    %v311 = vpop.f32.mrb[0].mxu0
    %312 = vdwg.mxu0
    %313 = vrot.lane.b32.xlu0 %v62, 16
    %v314 = vpop.permute.xlu0 %313
    %v316 = vsel %vm229, %v310, %v314
    %vm317 = vcmask 392192
    %v318 = vsel %vm317, %v316, 0.0
    %319 = vst [vmem:[%s6] sm:$0x3] %v318
    // Predicated region
    $region34: #{classification_net_forward.1} parent=1 // pred_check
      _
    $region35: #{classification_net_forward.1} parent=1 // pred_check_branch
      %321 = sbr.rel (0) target = $region37
    $region36: #{classification_net_forward.1} parent=1 // pred_region
      _
    $region37: #{classification_net_forward.1} parent=1 // pred_fallthru
      _
    // Predicated region
    $region38: #{classification_net_forward.1} parent=1 // pred_check
      _
    $region39: #{classification_net_forward.1} parent=1 // pred_check_branch
      %323 = sbr.rel (0) target = $region41
    $region40: #{classification_net_forward.1} parent=1 // pred_region
      _
    $region41: #{classification_net_forward.1} parent=1 // pred_fallthru
      _
    %324 = vsyncpa [#allocation4], 1
    %325 = vsyncpa [#allocation5], 1

</llo_original>
